<compile_context>
chip_gen: v5e
topology: v5e:2x2
jax: 0.10.0
libtpu: 0.0.40
codegen_flags: <defaults>
</compile_context>

<pallas_src>
import functools

import jax
import jax.numpy as jnp
from jax.experimental import pallas as pl
from jax.experimental.pallas import tpu as pltpu


def _ceil_div(a, b):
    return -(-a // b)


# --------------------------------------------------------------------------
# Kernel 1: per-sample sigmoid-loss statistics, tiled over samples (lanes).
# --------------------------------------------------------------------------
def _pu_stats_kernel(yp_ref, yt_ref, stats_ref, f_ref, acc_ref, *,
                     n, d, lanes_ragged):
    """Blocks:
         yp_ref : (D, tN) f32  -- y_pred transposed (samples along lanes)
         yt_ref : (1, tN) f32  -- y_true
       Outputs:
         stats_ref : (4, 128) f32 VMEM, resident; row r broadcast-holds
           [0] num_Pn = sum_i y_true[i] * sum_d sigmoid(y_pred[i,d])
           [1] num_Pu = sum_i u_mask[i] * sum_d sigmoid(y_pred[i,d])
           [2] P_size = sum_i y_true[i]
           [3] u_size = sum_i |y_true[i] - 1|
         f_ref : (1, tN) f32   -- f[i] = sum_d (2*y_pred[i,d] - 1)
       Scratch:
         acc_ref : SMEM (4,) f32 running sums across grid steps.
    """
    step = pl.program_id(0)
    nsteps = pl.num_programs(0)
    t_n = yt_ref.shape[1]

    @pl.when(step == 0)
    def _():
        acc_ref[0] = jnp.float32(0.0)
        acc_ref[1] = jnp.float32(0.0)
        acc_ref[2] = jnp.float32(0.0)
        acc_ref[3] = jnp.float32(0.0)

    yp = yp_ref[...].astype(jnp.float32)                    # (D, tN)
    yt = yt_ref[...].astype(jnp.float32)                    # (1, tN)

    # One EUP exp per element; per-sample sum of sigmoid over the D logits.
    s_pos = jnp.sum(1.0 / (1.0 + jnp.exp(-yp)), axis=0, keepdims=True)

    if lanes_ragged:
        # Tail lanes of the edge block hold unspecified data; mask them out.
        lane = jax.lax.broadcasted_iota(jnp.int32, (1, t_n), 1)
        valid = (step * t_n + lane) < n
        yt = jnp.where(valid, yt, 0.0)
        u_mask = jnp.where(valid, jnp.abs(yt - 1.0), 0.0)
        s_pos = jnp.where(valid, s_pos, 0.0)
    else:
        u_mask = jnp.abs(yt - 1.0)

    acc_ref[0] += jnp.sum(s_pos * yt)
    acc_ref[1] += jnp.sum(s_pos * u_mask)
    acc_ref[2] += jnp.sum(yt)
    acc_ref[3] += jnp.sum(u_mask)

    # Per-sample row sums of F = 2*y_pred - 1, used by the manifold term.
    f_ref[...] = 2.0 * jnp.sum(yp, axis=0, keepdims=True) - d

    @pl.when(step == nsteps - 1)
    def _():
        ones = jnp.ones((1, 128), jnp.float32)
        stats_ref[0:1, :] = ones * acc_ref[0]
        stats_ref[1:2, :] = ones * acc_ref[1]
        stats_ref[2:3, :] = ones * acc_ref[2]
        stats_ref[3:4, :] = ones * acc_ref[3]


def _pu_sigmoid_stats(yp_t, yt_row, n, d):
    """Returns (stats[4], f_col (1, n))."""
    lane_tile = 16384
    t_n = min(lane_tile, (n // 128) * 128) if n >= 128 else n
    nsteps = _ceil_div(n, t_n)
    lanes_ragged = (n % t_n) != 0
    kernel = functools.partial(_pu_stats_kernel, n=n, d=float(d),
                               lanes_ragged=lanes_ragged)
    stats, f_col = pl.pallas_call(
        kernel,
        out_shape=(jax.ShapeDtypeStruct((4, 128), jnp.float32),
                   jax.ShapeDtypeStruct((1, n), jnp.float32)),
        grid_spec=pltpu.PrefetchScalarGridSpec(
            num_scalar_prefetch=0,
            grid=(nsteps,),
            in_specs=[pl.BlockSpec((d, t_n), lambda i: (0, i)),
                      pl.BlockSpec((1, t_n), lambda i: (0, i))],
            out_specs=[pl.BlockSpec((4, 128), lambda i: (0, 0)),
                       pl.BlockSpec((1, t_n), lambda i: (0, i))],
            scratch_shapes=[pltpu.SMEM((4,), jnp.float32)]),
        compiler_params=pltpu.CompilerParams(
            dimension_semantics=("arbitrary",)),
    )(yp_t, yt_row)
    return stats[:, 0], f_col


# --------------------------------------------------------------------------
# Kernel 2: manifold quadratic form  sum_ij L[i,j] * f[i] * f[j], tiled.
# --------------------------------------------------------------------------
def _pu_manifold_kernel(L_ref, frow_ref, fcol_ref, out_ref, acc_ref, *,
                        n, tm, tn, row_ragged, col_ragged):
    i = pl.program_id(0)
    j = pl.program_id(1)
    num_j = pl.num_programs(1)

    @pl.when(j == 0)
    def _():
        acc_ref[...] = jnp.zeros_like(acc_ref)

    l_tile = L_ref[...].astype(jnp.float32)                 # (tm, tn)

    # Tail masking (only compiled in for ragged shapes): OOB parts of an edge
    # block contain unspecified data and must be explicitly zeroed.
    if col_ragged:
        col = j * tn + jax.lax.broadcasted_iota(jnp.int32, (1, tn), 1)
        l_tile = jnp.where(col < n, l_tile, 0.0)
    if row_ragged:
        row = i * tm + jax.lax.broadcasted_iota(jnp.int32, (tm, 1), 0)
        l_tile = jnp.where(row < n, l_tile, 0.0)

    # One full-tile VPU multiply + lane (XLU) reduce per step.
    acc_ref[...] += jnp.sum(l_tile * fcol_ref[...], axis=1, keepdims=True)

    @pl.when(j == num_j - 1)
    def _():
        # frow multiply + sublane reduce once per row block.
        part = jnp.sum(acc_ref[...] * frow_ref[...], axis=0, keepdims=True)
        out_ref[...] = jnp.broadcast_to(part, out_ref.shape)


def _manifold_quadratic_form(L, f_col):
    """Returns sum(F^T @ L @ F) = f^T @ L @ f, streaming L in large tiles."""
    n = L.shape[0]
    # Lane-wide tiles (<= 512 x 2048 f32 = 4 MiB/tile).  Tile dims never exceed
    # the array dims; ragged tails are handled by in-kernel masking.
    tn = min(2048, (n // 128) * 128) if n >= 128 else n
    tm = min(512, (n // 8) * 8) if n >= 8 else n
    num_i = _ceil_div(n, tm)
    num_j = _ceil_div(n, tn)
    row_ragged = (n % tm) != 0
    col_ragged = (n % tn) != 0

    # f is tiny (4n bytes); zero-pad it so its blocks never go out of bounds.
    n_r, n_c = num_i * tm, num_j * tn
    f_col_p = f_col if n_c == n else jnp.pad(f_col, ((0, 0), (0, n_c - n)))
    f_row_p = f_col.reshape(n, 1)
    if n_r != n:
        f_row_p = jnp.pad(f_row_p, ((0, n_r - n), (0, 0)))

    kernel = functools.partial(_pu_manifold_kernel, n=n, tm=tm, tn=tn,
                               row_ragged=row_ragged, col_ragged=col_ragged)
    partials = pl.pallas_call(
        kernel,
        out_shape=jax.ShapeDtypeStruct((num_i, 8, 128), jnp.float32),
        grid_spec=pltpu.PrefetchScalarGridSpec(
            num_scalar_prefetch=0,
            grid=(num_i, num_j),
            in_specs=[
                # TODO(synk): sweep pipeline_mode=pl.Buffered(3) on v7x if xprof
                # still shows exposed DMA on the L stream.
                pl.BlockSpec((tm, tn), lambda i, j: (i, j)),
                pl.BlockSpec((tm, 1), lambda i, j: (i, 0)),
                pl.BlockSpec((1, tn), lambda i, j: (0, j)),
            ],
            out_specs=pl.BlockSpec((1, 8, 128), lambda i, j: (i, 0, 0)),
            scratch_shapes=[pltpu.VMEM((tm, 1), jnp.float32)]),
        compiler_params=pltpu.CompilerParams(
            # Row blocks are independent -> shard them across TensorCores (v7x
            # megacore); the column axis reduces into the per-row accumulator.
            dimension_semantics=("parallel", "arbitrary"),
            vmem_limit_bytes=32 * 1024 * 1024),
        cost_estimate=pl.CostEstimate(
            flops=2 * n * n,
            transcendentals=0,
            bytes_accessed=int(L.dtype.itemsize) * n * n + 8 * n + 4 * num_i),
    )(L, f_row_p, f_col_p)
    # One scalar partial per row block (broadcast over its (1,8,128) slab).
    return jnp.sum(partials[:, 0, 0])


# --------------------------------------------------------------------------
# Wrapper mirroring pu_loss(..., loss_fn='sigmoid').
# --------------------------------------------------------------------------
def pu_loss_pallas(y_pred, y_true, L=None, *, loss_fn="sigmoid",
                   Probility_P=0.25, BETA=0.0, gamma=1.0, Yi=1e-08):
    """JAX/Pallas equivalent of pu_loss(...) with loss_fn='sigmoid'."""
    # TODO(synk): the 'focal' path (one_hot scatter + focal_loss) is not
    # implemented; only the default 'sigmoid' path of PULoss is reproduced.
    assert loss_fn == "sigmoid", "only the default sigmoid path is implemented"

    y_pred = jnp.asarray(y_pred, jnp.float32)
    n, d = y_pred.shape
    # TODO(synk): y_pred.T is a separate XLA transpose (one extra HBM pass over
    # y_pred).  Negligible when L is present; on the L=None path fuse it into
    # the producer (or emit y_pred already transposed) if that path dominates.
    yp_t = y_pred.T                                          # (D, N) lane-dense
    yt_row = jnp.asarray(y_true, jnp.float32).reshape(1, n)

    stats, f_col = _pu_sigmoid_stats(yp_t, yt_row, n, d)
    num_Pn, num_Pu, P_size, u_size = stats[0], stats[1], stats[2], stats[3]
    # Exact identity: sum_d sigmoid(-x_d) = D - sum_d sigmoid(x_d).
    # (Catastrophic cancellation only for very large positive logits; fine at
    #  the tolerances used here — compute sigmoid(-x) directly if they tighten.)
    num_Pp = d * P_size - num_Pn

    # `x if size > 0 else 0` from pu_risk_estimators_sigmoid.
    P_p = jnp.where(P_size > 0, num_Pp / P_size, 0.0)
    P_n = jnp.where(P_size > 0, num_Pn / P_size, 0.0)
    P_u = jnp.where(u_size > 0, num_Pu / u_size, 0.0)

    if L is None:
        # torch: M_reg = zeros(1) -> sum(M_reg) == 0; skip the L stream.
        m_reg_sum = jnp.float32(0.0)
    else:
        L_arr = jnp.asarray(L)
        if L_arr.dtype != jnp.bfloat16:   # bf16 L streams at half the HBM bytes
            L_arr = L_arr.astype(jnp.float32)
        m_reg_sum = jnp.float32(Yi) * _manifold_quadratic_form(L_arr, f_col)

    PU_1 = Probility_P * P_p + P_u - Probility_P * P_n
    PU_2 = P_u - Probility_P * P_n
    loss = jnp.where(-BETA > PU_2,
                     -gamma * PU_2 + m_reg_sum,
                     PU_1 + m_reg_sum)
    return loss, m_reg_sum


class PULoss:
    """Thin wrapper mirroring the PyTorch module interface."""

    def __init__(self, loss_fn="sigmoid", Probility_P=0.25, BETA=0, gamma=1.0, Yi=1e-08):
        self.loss_fn = loss_fn
        self.Probility_P = Probility_P
        self.BETA = BETA
        self.gamma = gamma
        self.Yi = Yi

    def __call__(self, y_pred, y_true, L=None):
        return pu_loss_pallas(y_pred, y_true, L, loss_fn=self.loss_fn,
                              Probility_P=self.Probility_P, BETA=self.BETA,
                              gamma=self.gamma, Yi=self.Yi)


def _pu_loss_reference(y_pred, y_true, L, Probility_P=0.25, BETA=0.0, gamma=1.0, Yi=1e-08):
    """Pure-JAX reference for correctness checking (no MXU in the quad form)."""
    yp = jnp.asarray(y_pred, jnp.float32)
    yt = jnp.asarray(y_true, jnp.float32).reshape(-1, 1)
    u_mask = jnp.abs(yt - 1.0)
    s_neg = jnp.sum(jax.nn.sigmoid(-yp), axis=1, keepdims=True)
    s_pos = jnp.sum(jax.nn.sigmoid(yp), axis=1, keepdims=True)
    P_size = jnp.sum(yt)
    u_size = jnp.sum(u_mask)
    P_p = jnp.where(P_size > 0, jnp.sum(s_neg * yt) / P_size, 0.0)
    P_n = jnp.where(P_size > 0, jnp.sum(s_pos * yt) / P_size, 0.0)
    P_u = jnp.where(u_size > 0, jnp.sum(s_pos * u_mask) / u_size, 0.0)
    if L is not None:
        f = jnp.sum(2.0 * yp - 1.0, axis=1)
        La = jnp.asarray(L, jnp.float32)
        m = jnp.float32(Yi) * jnp.sum((La * f[None, :]).sum(axis=1) * f)
    else:
        m = jnp.float32(0.0)
    PU_1 = Probility_P * P_p + P_u - Probility_P * P_n
    PU_2 = P_u - Probility_P * P_n
    loss = jnp.where(-BETA > PU_2, -gamma * PU_2 + m, PU_1 + m)
    return loss, m


if __name__ == "__main__":
    key = jax.random.PRNGKey(0)
    k1, k2, k3 = jax.random.split(key, 3)

    loss_module = PULoss()

    def run_case(n, d, with_L):
        y_pred = jax.random.normal(k1, (n, d), dtype=jnp.float32)
        # PU labels: 1 = positive (labeled), 0 = unlabeled.
        y_true = (jax.random.uniform(k2, (n,)) < 0.3).astype(jnp.float32)
        L = None
        if with_L:
            A = jax.random.normal(k3, (n, n), dtype=jnp.float32) * 0.1
            L = 0.5 * (A + A.T)  # symmetric "Laplacian-like" manifold matrix
        loss, m = loss_module(y_pred, y_true, L)
        loss, m = jax.block_until_ready((loss, m))
        ref_loss, ref_m = _pu_loss_reference(y_pred, y_true, L)
        assert jnp.allclose(loss, ref_loss, rtol=1e-3, atol=1e-5), (n, loss, ref_loss)
        assert jnp.allclose(m, ref_m, rtol=1e-3, atol=1e-6), (n, m, ref_m)

    run_case(128, 4, True)    # divisible shapes, single tile
    run_case(128, 4, False)   # L=None path (manifold kernel skipped)
    run_case(96, 4, True)     # N < 128: full-dim blocks
    run_case(300, 4, True)    # ragged: exercises tail masking + per-row partials

    print("KERNEL_OK")
</pallas_src>

<mosaic_0001>
module attributes {stable_mosaic.version = 11 : i64} {
  func.func @_pu_stats_kernel(%arg0: i32, %arg1: memref<4x128xf32, #tpu.memory_space<vmem>>, %arg2: memref<1x128xf32, #tpu.memory_space<vmem>>, %arg3: memref<4x128xf32, #tpu.memory_space<vmem>>, %arg4: memref<1x128xf32, #tpu.memory_space<vmem>>, %arg5: memref<4xf32, #tpu.memory_space<smem>>) attributes {dimension_semantics = [#tpu.dimension_semantics<arbitrary>], iteration_bounds = array<i64: 1>, scalar_prefetch = 0 : i64, scratch_operands = 1 : i64, tpu.core_type = #tpu.core_type<tc>, window_params = [{transform_indices = @transform_0, window_bounds = array<i64: 4, 128>}, {transform_indices = @transform_1, window_bounds = array<i64: 1, 128>}, {pipeline_mode = #tpu.pipeline_mode<synchronous>, transform_indices = @transform_2, window_bounds = array<i64: 4, 128>}, {transform_indices = @transform_3, window_bounds = array<i64: 1, 128>}]} {
    %c0_i32 = arith.constant 0 : i32
    %0 = arith.cmpi eq, %arg0, %c0_i32 : i32
    %1 = arith.extui %0 : i1 to i32
    %c0_i32_0 = arith.constant 0 : i32
    %2 = arith.cmpi ne, %1, %c0_i32_0 : i32
    scf.if %2 {
      %cst_24 = arith.constant 0.000000e+00 : f32
      %c0_25 = arith.constant 0 : index
      %57 = memref.load %arg5[%c0_25] : memref<4xf32, #tpu.memory_space<smem>>
      memref.store %cst_24, %arg5[%c0_25] : memref<4xf32, #tpu.memory_space<smem>>
      %cst_26 = arith.constant 0.000000e+00 : f32
      %c1_27 = arith.constant 1 : index
      %58 = memref.load %arg5[%c1_27] : memref<4xf32, #tpu.memory_space<smem>>
      memref.store %cst_26, %arg5[%c1_27] : memref<4xf32, #tpu.memory_space<smem>>
      %cst_28 = arith.constant 0.000000e+00 : f32
      %c2_29 = arith.constant 2 : index
      %59 = memref.load %arg5[%c2_29] : memref<4xf32, #tpu.memory_space<smem>>
      memref.store %cst_28, %arg5[%c2_29] : memref<4xf32, #tpu.memory_space<smem>>
      %cst_30 = arith.constant 0.000000e+00 : f32
      %c3_31 = arith.constant 3 : index
      %60 = memref.load %arg5[%c3_31] : memref<4xf32, #tpu.memory_space<smem>>
      memref.store %cst_30, %arg5[%c3_31] : memref<4xf32, #tpu.memory_space<smem>>
    } else {
    }
    %c0 = arith.constant 0 : index
    %c0_1 = arith.constant 0 : index
    %3 = vector.load %arg1[%c0, %c0_1] : memref<4x128xf32, #tpu.memory_space<vmem>>, vector<4x128xf32>
    %c0_2 = arith.constant 0 : index
    %c0_3 = arith.constant 0 : index
    %4 = vector.load %arg2[%c0_2, %c0_3] : memref<1x128xf32, #tpu.memory_space<vmem>>, vector<1x128xf32>
    %cst = arith.constant 0.000000e+00 : f32
    %5 = vector.broadcast %cst : f32 to vector<4x128xf32>
    %6 = arith.subf %5, %3 : vector<4x128xf32>
    %7 = math.exp %6 : vector<4x128xf32>
    %cst_4 = arith.constant 1.000000e+00 : f32
    %8 = vector.broadcast %cst_4 : f32 to vector<4x128xf32>
    %9 = arith.addf %8, %7 : vector<4x128xf32>
    %cst_5 = arith.constant 1.000000e+00 : f32
    %10 = vector.broadcast %cst_5 : f32 to vector<4x128xf32>
    %11 = arith.divf %10, %9 : vector<4x128xf32>
    %cst_6 = arith.constant dense<0.000000e+00> : vector<128xf32>
    %12 = vector.multi_reduction <add>, %11, %cst_6 [0] : vector<4x128xf32> to vector<128xf32>
    %13 = vector.shape_cast %12 : vector<128xf32> to vector<1x128xf32>
    %cst_7 = arith.constant 1.000000e+00 : f32
    %14 = vector.broadcast %cst_7 : f32 to vector<1x128xf32>
    %15 = arith.subf %4, %14 : vector<1x128xf32>
    %16 = math.absf %15 : vector<1x128xf32>
    %c0_8 = arith.constant 0 : index
    %17 = memref.load %arg5[%c0_8] : memref<4xf32, #tpu.memory_space<smem>>
    %18 = arith.mulf %13, %4 : vector<1x128xf32>
    %19 = vector.shape_cast %18 : vector<1x128xf32> to vector<1x1x128xf32>
    %cst_9 = arith.constant dense<0.000000e+00> : vector<1xf32>
    %20 = vector.multi_reduction <add>, %19, %cst_9 [1, 2] : vector<1x1x128xf32> to vector<1xf32>
    %21 = vector.shape_cast %20 : vector<1xf32> to vector<1x1x1xf32>
    %22 = vector.extract %21[0, 0, 0] : f32 from vector<1x1x1xf32>
    %23 = arith.addf %17, %22 : f32
    %c0_10 = arith.constant 0 : index
    %24 = memref.load %arg5[%c0_10] : memref<4xf32, #tpu.memory_space<smem>>
    memref.store %23, %arg5[%c0_10] : memref<4xf32, #tpu.memory_space<smem>>
    %c1 = arith.constant 1 : index
    %25 = memref.load %arg5[%c1] : memref<4xf32, #tpu.memory_space<smem>>
    %26 = arith.mulf %13, %16 : vector<1x128xf32>
    %27 = vector.shape_cast %26 : vector<1x128xf32> to vector<1x1x128xf32>
    %cst_11 = arith.constant dense<0.000000e+00> : vector<1xf32>
    %28 = vector.multi_reduction <add>, %27, %cst_11 [1, 2] : vector<1x1x128xf32> to vector<1xf32>
    %29 = vector.shape_cast %28 : vector<1xf32> to vector<1x1x1xf32>
    %30 = vector.extract %29[0, 0, 0] : f32 from vector<1x1x1xf32>
    %31 = arith.addf %25, %30 : f32
    %c1_12 = arith.constant 1 : index
    %32 = memref.load %arg5[%c1_12] : memref<4xf32, #tpu.memory_space<smem>>
    memref.store %31, %arg5[%c1_12] : memref<4xf32, #tpu.memory_space<smem>>
    %c2 = arith.constant 2 : index
    %33 = memref.load %arg5[%c2] : memref<4xf32, #tpu.memory_space<smem>>
    %34 = vector.shape_cast %4 : vector<1x128xf32> to vector<1x1x128xf32>
    %cst_13 = arith.constant dense<0.000000e+00> : vector<1xf32>
    %35 = vector.multi_reduction <add>, %34, %cst_13 [1, 2] : vector<1x1x128xf32> to vector<1xf32>
    %36 = vector.shape_cast %35 : vector<1xf32> to vector<1x1x1xf32>
    %37 = vector.extract %36[0, 0, 0] : f32 from vector<1x1x1xf32>
    %38 = arith.addf %33, %37 : f32
    %c2_14 = arith.constant 2 : index
    %39 = memref.load %arg5[%c2_14] : memref<4xf32, #tpu.memory_space<smem>>
    memref.store %38, %arg5[%c2_14] : memref<4xf32, #tpu.memory_space<smem>>
    %c3 = arith.constant 3 : index
    %40 = memref.load %arg5[%c3] : memref<4xf32, #tpu.memory_space<smem>>
    %41 = vector.shape_cast %16 : vector<1x128xf32> to vector<1x1x128xf32>
    %cst_15 = arith.constant dense<0.000000e+00> : vector<1xf32>
    %42 = vector.multi_reduction <add>, %41, %cst_15 [1, 2] : vector<1x1x128xf32> to vector<1xf32>
    %43 = vector.shape_cast %42 : vector<1xf32> to vector<1x1x1xf32>
    %44 = vector.extract %43[0, 0, 0] : f32 from vector<1x1x1xf32>
    %45 = arith.addf %40, %44 : f32
    %c3_16 = arith.constant 3 : index
    %46 = memref.load %arg5[%c3_16] : memref<4xf32, #tpu.memory_space<smem>>
    memref.store %45, %arg5[%c3_16] : memref<4xf32, #tpu.memory_space<smem>>
    %cst_17 = arith.constant dense<0.000000e+00> : vector<128xf32>
    %47 = vector.multi_reduction <add>, %3, %cst_17 [0] : vector<4x128xf32> to vector<128xf32>
    %48 = vector.shape_cast %47 : vector<128xf32> to vector<1x128xf32>
    %cst_18 = arith.constant 2.000000e+00 : f32
    %49 = vector.broadcast %cst_18 : f32 to vector<1x128xf32>
    %50 = arith.mulf %49, %48 : vector<1x128xf32>
    %cst_19 = arith.constant 4.000000e+00 : f32
    %51 = vector.broadcast %cst_19 : f32 to vector<1x128xf32>
    %52 = arith.subf %50, %51 : vector<1x128xf32>
    %c0_20 = arith.constant 0 : index
    %c0_21 = arith.constant 0 : index
    %53 = vector.load %arg4[%c0_20, %c0_21] : memref<1x128xf32, #tpu.memory_space<vmem>>, vector<1x128xf32>
    tpu.vector_store %arg4[%c0_20, %c0_21], %52 {strides = array<i32>} : memref<1x128xf32, #tpu.memory_space<vmem>>, vector<1x128xf32>,
    %c0_i32_22 = arith.constant 0 : i32
    %54 = arith.cmpi eq, %arg0, %c0_i32_22 : i32
    %55 = arith.extui %54 : i1 to i32
    %c0_i32_23 = arith.constant 0 : i32
    %56 = arith.cmpi ne, %55, %c0_i32_23 : i32
    scf.if %56 {
      %cst_24 = arith.constant 1.000000e+00 : f32
      %57 = vector.broadcast %cst_24 : f32 to vector<1x128xf32>
      %c0_25 = arith.constant 0 : index
      %58 = memref.load %arg5[%c0_25] : memref<4xf32, #tpu.memory_space<smem>>
      %59 = vector.broadcast %58 : f32 to vector<1x128xf32>
      %60 = arith.mulf %57, %59 : vector<1x128xf32>
      %c0_26 = arith.constant 0 : index
      %c0_27 = arith.constant 0 : index
      %61 = vector.load %arg3[%c0_26, %c0_27] : memref<4x128xf32, #tpu.memory_space<vmem>>, vector<1x128xf32>
      tpu.vector_store %arg3[%c0_26, %c0_27], %60 {strides = array<i32>} : memref<4x128xf32, #tpu.memory_space<vmem>>, vector<1x128xf32>,
      %c1_28 = arith.constant 1 : index
      %62 = memref.load %arg5[%c1_28] : memref<4xf32, #tpu.memory_space<smem>>
      %63 = vector.broadcast %62 : f32 to vector<1x128xf32>
      %64 = arith.mulf %57, %63 : vector<1x128xf32>
      %c1_29 = arith.constant 1 : index
      %c0_30 = arith.constant 0 : index
      %65 = vector.load %arg3[%c1_29, %c0_30] : memref<4x128xf32, #tpu.memory_space<vmem>>, vector<1x128xf32>
      tpu.vector_store %arg3[%c1_29, %c0_30], %64 {strides = array<i32>} : memref<4x128xf32, #tpu.memory_space<vmem>>, vector<1x128xf32>,
      %c2_31 = arith.constant 2 : index
      %66 = memref.load %arg5[%c2_31] : memref<4xf32, #tpu.memory_space<smem>>
      %67 = vector.broadcast %66 : f32 to vector<1x128xf32>
      %68 = arith.mulf %57, %67 : vector<1x128xf32>
      %c2_32 = arith.constant 2 : index
      %c0_33 = arith.constant 0 : index
      %69 = vector.load %arg3[%c2_32, %c0_33] : memref<4x128xf32, #tpu.memory_space<vmem>>, vector<1x128xf32>
      tpu.vector_store %arg3[%c2_32, %c0_33], %68 {strides = array<i32>} : memref<4x128xf32, #tpu.memory_space<vmem>>, vector<1x128xf32>,
      %c3_34 = arith.constant 3 : index
      %70 = memref.load %arg5[%c3_34] : memref<4xf32, #tpu.memory_space<smem>>
      %71 = vector.broadcast %70 : f32 to vector<1x128xf32>
      %72 = arith.mulf %57, %71 : vector<1x128xf32>
      %c3_35 = arith.constant 3 : index
      %c0_36 = arith.constant 0 : index
      %73 = vector.load %arg3[%c3_35, %c0_36] : memref<4x128xf32, #tpu.memory_space<vmem>>, vector<1x128xf32>
      tpu.vector_store %arg3[%c3_35, %c0_36], %72 {strides = array<i32>} : memref<4x128xf32, #tpu.memory_space<vmem>>, vector<1x128xf32>,
    } else {
    }
    return
  }
  func.func @transform_0(%arg0: i32) -> (i32, i32) {
    %c0_i32 = arith.constant 0 : i32
    %c0_i32_0 = arith.constant 0 : i32
    return %c0_i32, %arg0 : i32, i32
  }
  func.func @transform_1(%arg0: i32) -> (i32, i32) {
    %c0_i32 = arith.constant 0 : i32
    %c0_i32_0 = arith.constant 0 : i32
    return %c0_i32, %arg0 : i32, i32
  }
  func.func @transform_2(%arg0: i32) -> (i32, i32) {
    %c0_i32 = arith.constant 0 : i32
    %c0_i32_0 = arith.constant 0 : i32
    %c0_i32_1 = arith.constant 0 : i32
    return %c0_i32, %c0_i32_0 : i32, i32
  }
  func.func @transform_3(%arg0: i32) -> (i32, i32) {
    %c0_i32 = arith.constant 0 : i32
    %c0_i32_0 = arith.constant 0 : i32
    return %c0_i32, %arg0 : i32, i32
  }
}

</mosaic_0001>

<llo_original>
// kernel: tpu_custom_call.1
$region0: #{tpu_custom_call.1}
  #allocation0 [shape = 'u32[]', space=smem, size = 0x4, offset = 0x4, fixed_abs, tag = 'smem constant byte address 0x4 - core index']
  #allocation1 [shape = 'u32[72,128]{1,0:T(1,128)}', space=vmem, size = 0x9000, scoped, tag = 'internal scratch']
  #allocation2 [shape = 'f32[4]{0:T(128)}', space=smem, size = 0x200, scoped, tag = 'scratch operand']
  %s0 = inlined_call_operand.hbm [shape: f32[4,128], index: 0, kind: input, shape index: {}]
  %s1 = inlined_call_operand.hbm [shape: f32[1,128], index: 1, kind: input, shape index: {}]
  %s2 = inlined_call_operand.hbm [shape: f32[4,128], index: 2, kind: output, shape index: {0}]
  %s3 = inlined_call_operand.hbm [shape: f32[1,128], index: 3, kind: output, shape index: {1}]
  %4 = xla_tuple %s2, %s3
  %s5 = sld [smem:[#allocation0]]
  $region42: #{tpu_custom_call.1} parent=0
    _
  %s7 = ssub.s32 1, %s5
  %s8 = scalar_select 0, %s7, %s5
  $region1: #{tpu_custom_call.1} parent=0
    #allocation3 [shape = 'u8[2048]{0}', space=vmem, size = 0x800, scoped, tag = 'input window, operand 0, single buffered']
    #allocation4 [shape = 's32[1]{0}', space=sflag, size = 0x4, scoped, tag = 'scoped memory for tpu_custom_call.1']
    #allocation5 [shape = 's32[1]{0}', space=sflag, size = 0x4, scoped, tag = 'scoped memory for tpu_custom_call.1']
    #allocation6 [shape = 'u8[512]{0}', space=vmem, size = 0x400, scoped, tag = 'input window, operand 1, single buffered']
    #allocation7 [shape = 's32[1]{0}', space=sflag, size = 0x4, scoped, tag = 'scoped memory for tpu_custom_call.1']
    #allocation8 [shape = 'u8[2048]{0}', space=vmem, size = 0x800, scoped, tag = 'output window, operand 0, single buffered']
    #allocation9 [shape = 'u8[512]{0}', space=vmem, size = 0x400, scoped, tag = 'output window, operand 1, single buffered']
    #allocation10 [shape = 's32[1]{0}', space=sflag, size = 0x4, scoped, tag = 'scoped memory for tpu_custom_call.1']
    %9 = vsyncpa [#allocation4], 0
    %10 = vsyncpa [#allocation7], 0
    %11 = vsyncpa [#allocation5], 0
    %12 = vsyncpa [#allocation10], 0
    // Predicated region
    $region2: #{tpu_custom_call.1} parent=1 // pred_check
      _
    $region3: #{tpu_custom_call.1} parent=1 // pred_check_branch
      %14 = sbr.rel (0) target = $region5
    $region4: #{tpu_custom_call.1} parent=1 // pred_region
      %16 = vsyncadd [#allocation4], 0
      %s18 = sshll.u32 %s0, 4
      %s19 = int_to_ptr.hbm [resolvable:$true] %s18
      %s20 = sshll.u32 [#allocation3], 4
      %s21 = int_to_ptr.vmem [resolvable:$true] %s20
      %23 = dma.hbm_to_vmem [thread:$0]  %s19, 64, %s21, [#allocation4]
    $region5: #{tpu_custom_call.1} parent=1 // pred_fallthru
      _
    // Predicated region
    $region6: #{tpu_custom_call.1} parent=1 // pred_check
      _
    $region7: #{tpu_custom_call.1} parent=1 // pred_check_branch
      %25 = sbr.rel (0) target = $region9
    $region8: #{tpu_custom_call.1} parent=1 // pred_region
      %27 = vsyncadd [#allocation7], 0
      %s29 = sshll.u32 %s1, 4
      %s30 = int_to_ptr.hbm [resolvable:$true] %s29
      %s31 = sshll.u32 [#allocation6], 4
      %s32 = int_to_ptr.vmem [resolvable:$true] %s31
      %34 = dma.hbm_to_vmem [thread:$0]  %s30, 16, %s32, [#allocation7]
    $region9: #{tpu_custom_call.1} parent=1 // pred_fallthru
      _
    // Predicated region
    $region10: #{tpu_custom_call.1} parent=1 // pred_check
      _
    $region11: #{tpu_custom_call.1} parent=1 // pred_check_branch
      %36 = sbr.rel (0) target = $region13
    $region12: #{tpu_custom_call.1} parent=1 // pred_region
      %38 = dma.done [#allocation4], 64
    $region13: #{tpu_custom_call.1} parent=1 // pred_fallthru
      _
    // Predicated region
    $region14: #{tpu_custom_call.1} parent=1 // pred_check
      _
    $region15: #{tpu_custom_call.1} parent=1 // pred_check_branch
      %40 = sbr.rel (0) target = $region17
    $region16: #{tpu_custom_call.1} parent=1 // pred_region
      %42 = dma.done [#allocation7], 16
    $region17: #{tpu_custom_call.1} parent=1 // pred_fallthru
      _
    %p43 = scmp.eq.s32.totalorder 0, 0
    // Predicated region
    $region18: #{tpu_custom_call.1} parent=1 // pred_check
      %p44 = pneg %p43
    $region19: #{tpu_custom_call.1} parent=1 // pred_check_branch
      %46 = sbr.rel (%p44) target = $region21
    $region20: #{tpu_custom_call.1} parent=1 // pred_region
      %s47 = scalar_lea.smem [#allocation2], 0
      %48 = sst [smem:[%s47]] 0.0
      %s49 = scalar_lea.smem [#allocation2], 1
      %50 = sst [smem:[%s49]] 0.0
      %s51 = scalar_lea.smem [#allocation2], 2
      %52 = sst [smem:[%s51]] 0.0
      %s53 = scalar_lea.smem [#allocation2], 3
      %54 = sst [smem:[%s53]] 0.0
    $region21: #{tpu_custom_call.1} parent=1 // pred_fallthru
      _
    %v55 = vld [vmem:[#allocation3] sm:$0xf]
    %v56 = vld [vmem:[#allocation6] sm:$0x1]
    %v57 = vsub.f32 0.0, %v55
    %v58 = vmul.f32 %v57, 1.442695
    %v59 = vpow.pop %v58
    %v60 = vadd.f32 %v59, 1.0
    %v61 = vrcp.pop %v60
    %v62 = vmul.f32 %v60, %v61
    %v63 = vsub.f32 1.0, %v62
    %v64 = vmul.f32 %v61, %v63
    %v65 = vadd.f32 %v61, %v64
    %vm66 = vweird.f32 %v60
    %vm67 = vweird.f32 %v61
    %vm68 = vmor %vm66, %vm67
    %v69 = vsel %vm68, %v61, %v65
    %v70 = vand.u32 2147483647, %v60
    %vm71 = vcmp.eq.f32.partialorder %v70, 8.507059e+37
    %v72 = vand.u32 %v60, 2147483648
    %v73 = vor.u32 1.1754944e-38, %v72
    %v74 = vsel %vm71, %v73, %v69
    %v75 = vmul.f32 1.0, %v74
    %vm76 = vcmask 1043456
    %v77 = vsel %vm76, %v75, 0.0
    %v78 = vrot.slane %v77, 4
    %v79 = vadd.f32 %v77, %v78
    %v80 = vrot.slane %v79, 2
    %v81 = vadd.f32 %v79, %v80
    %v82 = vrot.slane %v81, 1
    %v83 = vadd.f32 %v81, %v82
    %v84 = vsub.f32 %v56, 1.0
    %v85 = vand.u32 2147483647, %v84
    %s86 = sld [smem:[#allocation2]]
    %v87 = vmul.f32 %v83, %v56
    %vm88 = vcmask 1040384
    %v89 = vsel %vm88, %v87, 0.0
    %90 = vadd.xlane.f32.xlu0 %v89
    %v91 = vpop.xlane.xlu0 %90
    %v92 = vrot.slane %v91, 4
    %v93 = vadd.f32 %v91, %v92
    %v94 = vrot.slane %v93, 2
    %v95 = vadd.f32 %v93, %v94
    %v96 = vrot.slane %v95, 1
    %v97 = vadd.f32 %v95, %v96
    %s98 = vtos %v97
    %s99 = sadd.f32 %s86, %s98
    %s100 = scalar_lea.smem [#allocation2], 0
    %101 = sst [smem:[%s100]] %s99
    %s102 = sld [smem:[#allocation2 + $0x1]]
    %v103 = vmul.f32 %v83, %v85
    %v104 = vsel %vm88, %v103, 0.0
    %105 = vadd.xlane.f32.xlu0 %v104
    %v106 = vpop.xlane.xlu0 %105
    %v107 = vrot.slane %v106, 4
    %v108 = vadd.f32 %v106, %v107
    %v109 = vrot.slane %v108, 2
    %v110 = vadd.f32 %v108, %v109
    %v111 = vrot.slane %v110, 1
    %v112 = vadd.f32 %v110, %v111
    %s113 = vtos %v112
    %s114 = sadd.f32 %s102, %s113
    %s115 = scalar_lea.smem [#allocation2], 1
    %116 = sst [smem:[%s115]] %s114
    %s117 = sld [smem:[#allocation2 + $0x2]]
    %v118 = vsel %vm88, %v56, 0.0
    %119 = vadd.xlane.f32.xlu0 %v118
    %v120 = vpop.xlane.xlu0 %119
    %v121 = vrot.slane %v120, 4
    %v122 = vadd.f32 %v120, %v121
    %v123 = vrot.slane %v122, 2
    %v124 = vadd.f32 %v122, %v123
    %v125 = vrot.slane %v124, 1
    %v126 = vadd.f32 %v124, %v125
    %s127 = vtos %v126
    %s128 = sadd.f32 %s117, %s127
    %s129 = scalar_lea.smem [#allocation2], 2
    %130 = sst [smem:[%s129]] %s128
    %s131 = sld [smem:[#allocation2 + $0x3]]
    %v132 = vsel %vm88, %v85, 0.0
    %133 = vadd.xlane.f32.xlu0 %v132
    %v134 = vpop.xlane.xlu0 %133
    %v135 = vrot.slane %v134, 4
    %v136 = vadd.f32 %v134, %v135
    %v137 = vrot.slane %v136, 2
    %v138 = vadd.f32 %v136, %v137
    %v139 = vrot.slane %v138, 1
    %v140 = vadd.f32 %v138, %v139
    %s141 = vtos %v140
    %s142 = sadd.f32 %s131, %s141
    %s143 = scalar_lea.smem [#allocation2], 3
    %144 = sst [smem:[%s143]] %s142
    %v145 = vsel %vm76, %v55, 0.0
    %v146 = vrot.slane %v145, 4
    %v147 = vadd.f32 %v145, %v146
    %v148 = vrot.slane %v147, 2
    %v149 = vadd.f32 %v147, %v148
    %v150 = vrot.slane %v149, 1
    %v151 = vadd.f32 %v149, %v150
    %v152 = vmul.f32 %v151, 2.0
    %v153 = vsub.f32 %v152, 4.0
    %154 = vst [vmem:[#allocation9] sm:$0x1] %v153
    // Predicated region
    $region22: #{tpu_custom_call.1} parent=1 // pred_check
      %p155 = pneg %p43
    $region23: #{tpu_custom_call.1} parent=1 // pred_check_branch
      %157 = sbr.rel (%p155) target = $region25
    $region24: #{tpu_custom_call.1} parent=1 // pred_region
      %s158 = sld [smem:[#allocation2]]
      %v159 = vstv %s158
      %160 = vst [vmem:[#allocation8] sm:$0x1] %v159
      %s161 = sld [smem:[#allocation2 + $0x1]]
      %v162 = vstv %s161
      %163 = vst [vmem:[#allocation8 + $0x1] sm:$0x1] %v162
      %s164 = sld [smem:[#allocation2 + $0x2]]
      %v165 = vstv %s164
      %166 = vst [vmem:[#allocation8 + $0x2] sm:$0x1] %v165
      %s167 = sld [smem:[#allocation2 + $0x3]]
      %v168 = vstv %s167
      %169 = vst [vmem:[#allocation8 + $0x3] sm:$0x1] %v168
    $region25: #{tpu_custom_call.1} parent=1 // pred_fallthru
      _
    // Predicated region
    $region26: #{tpu_custom_call.1} parent=1 // pred_check
      _
    $region27: #{tpu_custom_call.1} parent=1 // pred_check_branch
      %171 = sbr.rel (0) target = $region29
    $region28: #{tpu_custom_call.1} parent=1 // pred_region
      %173 = vsyncadd [#allocation5], 0
      %s175 = sshll.u32 [#allocation8], 4
      %s176 = int_to_ptr.vmem [resolvable:$true] %s175
      %s177 = sshll.u32 %s2, 4
      %s178 = int_to_ptr.hbm [resolvable:$true] %s177
      %180 = dma.vmem_to_hbm [thread:$0]  %s176, 64, %s178, [#allocation5]
    $region29: #{tpu_custom_call.1} parent=1 // pred_fallthru
      _
    // Predicated region
    $region30: #{tpu_custom_call.1} parent=1 // pred_check
      _
    $region31: #{tpu_custom_call.1} parent=1 // pred_check_branch
      %182 = sbr.rel (0) target = $region33
    $region32: #{tpu_custom_call.1} parent=1 // pred_region
      %184 = vsyncadd [#allocation10], 0
      %s186 = sshll.u32 [#allocation9], 4
      %s187 = int_to_ptr.vmem [resolvable:$true] %s186
      %s188 = sshll.u32 %s3, 4
      %s189 = int_to_ptr.hbm [resolvable:$true] %s188
      %191 = dma.vmem_to_hbm [thread:$0]  %s187, 16, %s189, [#allocation10]
    $region33: #{tpu_custom_call.1} parent=1 // pred_fallthru
      _
    // Predicated region
    $region34: #{tpu_custom_call.1} parent=1 // pred_check
      _
    $region35: #{tpu_custom_call.1} parent=1 // pred_check_branch
      %193 = sbr.rel (0) target = $region37
    $region36: #{tpu_custom_call.1} parent=1 // pred_region
      %195 = dma.done [#allocation5], 64
    $region37: #{tpu_custom_call.1} parent=1 // pred_fallthru
      _
    // Predicated region
    $region38: #{tpu_custom_call.1} parent=1 // pred_check
      _
    $region39: #{tpu_custom_call.1} parent=1 // pred_check_branch
      %197 = sbr.rel (0) target = $region41
    $region40: #{tpu_custom_call.1} parent=1 // pred_region
      %199 = dma.done [#allocation10], 16
    $region41: #{tpu_custom_call.1} parent=1 // pred_fallthru
      _
    %200 = vsyncpa [#allocation4], 1
    %201 = vsyncpa [#allocation7], 1
    %202 = vsyncpa [#allocation5], 1
    %203 = vsyncpa [#allocation10], 1

</llo_original>
